<compile_context>
chip_gen: v6e
topology: v6e:2x2x1
jax: 0.10.0
libtpu: 0.0.40
codegen_flags: <defaults>
</compile_context>

<pallas_src>
import jax
import jax.numpy as jnp
from jax.experimental import pallas as pl
from jax.experimental.pallas import tpu as pltpu

_SUBLANE_ALIGN = 32  # int8 packs 32 rows per sublane group


def _round_up(n, m):
    return ((n + m - 1) // m) * m


def _num_tensorcores():
    """Best-effort TensorCores-per-chip query (2 on v7x, else 1)."""
    try:
        kind = (getattr(jax.devices()[0], "device_kind", "") or "").lower()
        if "v7" in kind or "7x" in kind:
            return 2
    except Exception:
        pass
    return 1


def fpn_kernel(x_ref, w1_ref, b1_ref, w2_ref, b2_ref, o_ref):
    # x arrives as int8 {0,1}; cast to bf16 on the VPU (free filler) so the
    # HBM stream for x stays 1 byte/element.
    x = x_ref[...].astype(jnp.bfloat16)
    # fc1: (tb, fp_dim) @ (fp_dim, fp_2_dim), bf16 operands, f32 accumulation.
    h = jnp.dot(x, w1_ref[...], preferred_element_type=jnp.float32)
    h = h + b1_ref[...]                      # (1, fp_2_dim) f32 bias, broadcasts
    # dropout (eval mode) -> identity.
    # TODO(synk): training-mode dropout would need pltpu.prng_* masking here.
    h = jnp.maximum(h, 0.0)                  # ReLU in f32
    # fc2: cast activations to bf16 for the MXU, accumulate in f32.
    out = jnp.dot(h.astype(w2_ref.dtype), w2_ref[...],
                  preferred_element_type=jnp.float32)
    out = out + b2_ref[...]                  # (1, hidden) f32 bias
    o_ref[...] = out.astype(o_ref.dtype)


def fpn_forward(x, w1, b1, w2, b2, *, max_tb=1024, out_dtype=jnp.float32):
    """x: (B, fp_dim) Morgan bits {0,1}; w1: (fp_dim, fp_2_dim); w2: (fp_2_dim, hidden)."""
    B, fp_dim = x.shape
    fp_2_dim = w1.shape[1]
    hidden = w2.shape[1]

    # ---- tile selection (generation-aware) -----------------------------------
    # Pad batch to an int8-native sublane multiple (32).  Single-TC chips
    # (v5e/v6e): one grid step whenever the padded batch fits max_tb.  v7x
    # (2 TCs): force an even number of grid steps so the "parallel" batch axis
    # shards evenly across both TensorCores.
    b_pad = _round_up(max(B, _SUBLANE_ALIGN), _SUBLANE_ALIGN)
    n_tc = _num_tensorcores()

    steps = pl.cdiv(b_pad, max_tb)
    if n_tc > 1:
        steps = _round_up(max(steps, 2), 2)
    tb = _round_up(pl.cdiv(b_pad, steps), _SUBLANE_ALIGN)
    grid = pl.cdiv(b_pad, tb)
    if n_tc > 1:
        grid = _round_up(max(grid, 2), 2)
    b_pad = tb * grid

    if b_pad != B:
        x = jnp.pad(x, ((0, b_pad - B), (0, 0)))

    # ---- dtype plumbing: int8 x stream, bf16 weights, f32 biases -------------
    x_i8 = x.astype(jnp.int8)                 # Morgan bits {0,1}: exact in int8
    w1_bf = w1.astype(jnp.bfloat16)
    w2_bf = w2.astype(jnp.bfloat16)
    b1_2d = b1.reshape(1, fp_2_dim).astype(jnp.float32)
    b2_2d = b2.reshape(1, hidden).astype(jnp.float32)

    cost = pl.CostEstimate(
        flops=2 * b_pad * (fp_dim * fp_2_dim + fp_2_dim * hidden),
        transcendentals=0,
        bytes_accessed=(x_i8.size * 1 + w1_bf.size * 2 + w2_bf.size * 2
                        + b1_2d.size * 4 + b2_2d.size * 4
                        + b_pad * hidden * jnp.dtype(out_dtype).itemsize),
    )

    # Constant-index operands: fetched once, kept resident -> single-buffered.
    def _const_spec(shape):
        return pl.BlockSpec(shape, lambda i: (0, 0),
                            pipeline_mode=pl.Buffered(buffer_count=1))

    out = pl.pallas_call(
        fpn_kernel,
        out_shape=jax.ShapeDtypeStruct((b_pad, hidden), out_dtype),
        grid_spec=pltpu.PrefetchScalarGridSpec(
            num_scalar_prefetch=0,
            grid=(grid,),
            in_specs=[
                pl.BlockSpec((tb, fp_dim), lambda i: (i, 0)),   # x tile (int8)
                _const_spec((fp_dim, fp_2_dim)),                # W1 (resident)
                _const_spec((1, fp_2_dim)),                     # b1
                _const_spec((fp_2_dim, hidden)),                # W2 (resident)
                _const_spec((1, hidden)),                       # b2
            ],
            out_specs=pl.BlockSpec((tb, hidden), lambda i: (i, 0)),  # lane-dense
        ),
        compiler_params=pltpu.CompilerParams(
            dimension_semantics=("parallel",),
        ),
        cost_estimate=cost,
    )(x_i8, w1_bf, b1_2d, w2_bf, b2_2d)

    return out[:B]


def fpn_reference(x, w1, b1, w2, b2):
    h = jnp.maximum(x @ w1 + b1, 0.0)
    return h @ w2 + b2


if __name__ == "__main__":
    # Module hyperparameters (fp_dim fixed at 1024 by GetMorganFingerprintAsBitVect).
    batch = 64
    fp_dim = 1024
    fp_2_dim = 256
    hidden_dim = 128

    key = jax.random.PRNGKey(0)
    k_x, k_w1, k_b1, k_w2, k_b2 = jax.random.split(key, 5)

    # Synthetic Morgan-fingerprint-like input: binary {0,1} bits.
    x = jax.random.bernoulli(k_x, p=0.1, shape=(batch, fp_dim)).astype(jnp.float32)

    # PyTorch-Linear-style init: U(-1/sqrt(fan_in), +1/sqrt(fan_in)).
    bound1 = 1.0 / (fp_dim ** 0.5)
    w1 = jax.random.uniform(k_w1, (fp_dim, fp_2_dim), jnp.float32, -bound1, bound1)
    b1 = jax.random.uniform(k_b1, (fp_2_dim,), jnp.float32, -bound1, bound1)
    bound2 = 1.0 / (fp_2_dim ** 0.5)
    w2 = jax.random.uniform(k_w2, (fp_2_dim, hidden_dim), jnp.float32, -bound2, bound2)
    b2 = jax.random.uniform(k_b2, (hidden_dim,), jnp.float32, -bound2, bound2)

    out = fpn_forward(x, w1, b1, w2, b2)
    out = jax.block_until_ready(out)
    assert out.shape == (batch, hidden_dim)

    # Tight check: reference with the same bf16 weight rounding, f32 math
    # (x bits {0,1} are exact in every dtype used, so no input rounding).
    w1b = w1.astype(jnp.bfloat16).astype(jnp.float32)
    w2b = w2.astype(jnp.bfloat16).astype(jnp.float32)
    h_ref = jnp.maximum(x @ w1b + b1, 0.0).astype(jnp.bfloat16).astype(jnp.float32)
    ref_bf = h_ref @ w2b + b2
    assert jnp.allclose(out, ref_bf, atol=5e-3, rtol=5e-3), "mismatch vs bf16-emulated reference"

    # Loose check against the full-f32 reference (bf16 weight/activation rounding).
    ref_f32 = fpn_reference(x, w1, b1, w2, b2)
    assert jnp.allclose(out, ref_f32, atol=2e-2, rtol=2e-2), "mismatch vs f32 reference"

    print("KERNEL_OK")
</pallas_src>

<mosaic_0001>
module attributes {stable_mosaic.version = 11 : i64} {
  func.func @fpn_kernel(%arg0: i32, %arg1: memref<64x1024xi8, #tpu.memory_space<vmem>>, %arg2: memref<1024x256xbf16, #tpu.memory_space<vmem>>, %arg3: memref<1x256xf32, #tpu.memory_space<vmem>>, %arg4: memref<256x128xbf16, #tpu.memory_space<vmem>>, %arg5: memref<1x128xf32, #tpu.memory_space<vmem>>, %arg6: memref<64x128xf32, #tpu.memory_space<vmem>>) attributes {dimension_semantics = [#tpu.dimension_semantics<parallel>], iteration_bounds = array<i64: 1>, scalar_prefetch = 0 : i64, scratch_operands = 0 : i64, tpu.core_type = #tpu.core_type<tc>, window_params = [{transform_indices = @transform_0, window_bounds = array<i64: 64, 1024>}, {pipeline_mode = #tpu.pipeline_mode<synchronous>, transform_indices = @transform_1, window_bounds = array<i64: 1024, 256>}, {pipeline_mode = #tpu.pipeline_mode<synchronous>, transform_indices = @transform_2, window_bounds = array<i64: 1, 256>}, {pipeline_mode = #tpu.pipeline_mode<synchronous>, transform_indices = @transform_3, window_bounds = array<i64: 256, 128>}, {pipeline_mode = #tpu.pipeline_mode<synchronous>, transform_indices = @transform_4, window_bounds = array<i64: 1, 128>}, {transform_indices = @transform_5, window_bounds = array<i64: 64, 128>}]} {
    %c0 = arith.constant 0 : index
    %c0_0 = arith.constant 0 : index
    %0 = vector.load %arg1[%c0, %c0_0] : memref<64x1024xi8, #tpu.memory_space<vmem>>, vector<64x1024xi8>
    %1 = arith.sitofp %0 : vector<64x1024xi8> to vector<64x1024xbf16>
    %c0_1 = arith.constant 0 : index
    %c0_2 = arith.constant 0 : index
    %2 = vector.load %arg2[%c0_1, %c0_2] : memref<1024x256xbf16, #tpu.memory_space<vmem>>, vector<1024x256xbf16>
    %cst = arith.constant dense<0.000000e+00> : vector<64x256xf32>
    %3 = tpu.matmul %1, %2, %cst {dimension_numbers = #tpu.dot_dimension_numbers<[1], [0], [0], [1], [0, 0, 1, 1], [], []>} : vector<64x1024xbf16>, vector<1024x256xbf16>, vector<64x256xf32> -> vector<64x256xf32>
    %c0_3 = arith.constant 0 : index
    %c0_4 = arith.constant 0 : index
    %4 = vector.load %arg3[%c0_3, %c0_4] : memref<1x256xf32, #tpu.memory_space<vmem>>, vector<1x256xf32>
    %5 = vector.broadcast %4 : vector<1x256xf32> to vector<64x256xf32>
    %6 = arith.addf %3, %5 : vector<64x256xf32>
    %cst_5 = arith.constant 0.000000e+00 : f32
    %7 = vector.broadcast %cst_5 : f32 to vector<64x256xf32>
    %8 = arith.maximumf %6, %7 : vector<64x256xf32>
    %9 = arith.truncf %8 : vector<64x256xf32> to vector<64x256xbf16>
    %c0_6 = arith.constant 0 : index
    %c0_7 = arith.constant 0 : index
    %10 = vector.load %arg4[%c0_6, %c0_7] : memref<256x128xbf16, #tpu.memory_space<vmem>>, vector<256x128xbf16>
    %cst_8 = arith.constant dense<0.000000e+00> : vector<64x128xf32>
    %11 = tpu.matmul %9, %10, %cst_8 {dimension_numbers = #tpu.dot_dimension_numbers<[1], [0], [0], [1], [0, 0, 1, 1], [], []>} : vector<64x256xbf16>, vector<256x128xbf16>, vector<64x128xf32> -> vector<64x128xf32>
    %c0_9 = arith.constant 0 : index
    %c0_10 = arith.constant 0 : index
    %12 = vector.load %arg5[%c0_9, %c0_10] : memref<1x128xf32, #tpu.memory_space<vmem>>, vector<1x128xf32>
    %13 = vector.broadcast %12 : vector<1x128xf32> to vector<64x128xf32>
    %14 = arith.addf %11, %13 : vector<64x128xf32>
    %c0_11 = arith.constant 0 : index
    %c0_12 = arith.constant 0 : index
    %15 = vector.load %arg6[%c0_11, %c0_12] : memref<64x128xf32, #tpu.memory_space<vmem>>, vector<64x128xf32>
    tpu.vector_store %arg6[%c0_11, %c0_12], %14 {strides = array<i32>} : memref<64x128xf32, #tpu.memory_space<vmem>>, vector<64x128xf32>,
    return
  }
  func.func @transform_0(%arg0: i32) -> (i32, i32) {
    %c0_i32 = arith.constant 0 : i32
    %c0_i32_0 = arith.constant 0 : i32
    return %arg0, %c0_i32 : i32, i32
  }
  func.func @transform_1(%arg0: i32) -> (i32, i32) {
    %c0_i32 = arith.constant 0 : i32
    %c0_i32_0 = arith.constant 0 : i32
    %c0_i32_1 = arith.constant 0 : i32
    return %c0_i32, %c0_i32_0 : i32, i32
  }
  func.func @transform_2(%arg0: i32) -> (i32, i32) {
    %c0_i32 = arith.constant 0 : i32
    %c0_i32_0 = arith.constant 0 : i32
    %c0_i32_1 = arith.constant 0 : i32
    return %c0_i32, %c0_i32_0 : i32, i32
  }
  func.func @transform_3(%arg0: i32) -> (i32, i32) {
    %c0_i32 = arith.constant 0 : i32
    %c0_i32_0 = arith.constant 0 : i32
    %c0_i32_1 = arith.constant 0 : i32
    return %c0_i32, %c0_i32_0 : i32, i32
  }
  func.func @transform_4(%arg0: i32) -> (i32, i32) {
    %c0_i32 = arith.constant 0 : i32
    %c0_i32_0 = arith.constant 0 : i32
    %c0_i32_1 = arith.constant 0 : i32
    return %c0_i32, %c0_i32_0 : i32, i32
  }
  func.func @transform_5(%arg0: i32) -> (i32, i32) {
    %c0_i32 = arith.constant 0 : i32
    %c0_i32_0 = arith.constant 0 : i32
    return %arg0, %c0_i32 : i32, i32
  }
}

</mosaic_0001>

<llo_original>
// kernel: tpu_custom_call.1
$region0: #{tpu_custom_call.1}
  #allocation0 [shape = 'u32[]', space=smem, size = 0x4, offset = 0x4, fixed_abs, tag = 'smem constant byte address 0x4 - core index']
  #allocation1 [shape = 'u32[144,128]{1,0:T(1,128)}', space=vmem, size = 0x12000, scoped, tag = 'internal scratch']
  %s0 = inlined_call_operand.hbm [shape: s8[64,1024], index: 0, kind: input, shape index: {}]
  %s1 = inlined_call_operand.hbm [shape: bf16[1024,256], index: 1, kind: input, shape index: {}]
  %s2 = inlined_call_operand.vmem [shape: f32[1,256], index: 2, kind: input, shape index: {}]
  %s3 = inlined_call_operand.hbm [shape: bf16[256,128], index: 3, kind: input, shape index: {}]
  %s4 = inlined_call_operand.vmem [shape: f32[1,128], index: 4, kind: input, shape index: {}]
  %s5 = inlined_call_operand.hbm [shape: f32[64,128], index: 5, kind: output, shape index: {}]
  %s6 = sld [smem:[#allocation0]]
  $region42: #{tpu_custom_call.1} parent=0
    _
  %s8 = ssub.s32 1, %s6
  %s9 = scalar_select 0, %s8, %s6
  $region1: #{tpu_custom_call.1} parent=0
    #allocation2 [shape = 'u8[65536]{0}', space=vmem, size = 0x10000, scoped, tag = 'input window, operand 0, single buffered']
    #allocation3 [shape = 's32[1]{0}', space=sflag, size = 0x4, scoped, tag = 'scoped memory for tpu_custom_call.1']
    #allocation4 [shape = 's32[1]{0}', space=sflag, size = 0x4, scoped, tag = 'scoped memory for tpu_custom_call.1']
    #allocation5 [shape = 'u8[524288]{0}', space=vmem, size = 0x80000, scoped, tag = 'input window, operand 1, single buffered']
    #allocation6 [shape = 's32[1]{0}', space=sflag, size = 0x4, scoped, tag = 'scoped memory for tpu_custom_call.1']
    #allocation7 [shape = 'u8[65536]{0}', space=vmem, size = 0x10000, scoped, tag = 'input window, operand 3, single buffered']
    #allocation8 [shape = 'u8[32768]{0}', space=vmem, size = 0x8000, scoped, tag = 'output window, operand 0, single buffered']
    %10 = vsyncpa [#allocation3], 0
    %11 = vsyncpa [#allocation6], 0
    %12 = vsyncpa [#allocation4], 0
    // Predicated region
    $region2: #{tpu_custom_call.1} parent=1 // pred_check
      _
    $region3: #{tpu_custom_call.1} parent=1 // pred_check_branch
      %14 = sbr.rel (0) target = $region5
    $region4: #{tpu_custom_call.1} parent=1 // pred_region
      %s16 = ssub.s32 2048, 2048
      %17 = vsyncadd [#allocation3], %s16
      %s18 = sshll.u32 [#allocation2], 4
      %s19 = int_to_ptr.vmem [resolvable:$true] %s18
      %24 = dma.hbm_to_vmem [thread:$0]  %s0, 2048, %s19, [#allocation3], 1024, 1024, 64
    $region5: #{tpu_custom_call.1} parent=1 // pred_fallthru
      _
    // Predicated region
    $region6: #{tpu_custom_call.1} parent=1 // pred_check
      _
    $region7: #{tpu_custom_call.1} parent=1 // pred_check_branch
      %26 = sbr.rel (0) target = $region9
    $region8: #{tpu_custom_call.1} parent=1 // pred_region
      %s28 = ssub.s32 16384, 16384
      %29 = vsyncadd [#allocation6], %s28
      %s30 = sshll.u32 [#allocation5], 4
      %s31 = int_to_ptr.vmem [resolvable:$true] %s30
      %36 = dma.hbm_to_vmem [thread:$0]  %s1, 16384, %s31, [#allocation6], 128, 128, 8
    $region9: #{tpu_custom_call.1} parent=1 // pred_fallthru
      _
    // Predicated region
    $region10: #{tpu_custom_call.1} parent=1 // pred_check
      _
    $region11: #{tpu_custom_call.1} parent=1 // pred_check_branch
      %38 = sbr.rel (0) target = $region13
    $region12: #{tpu_custom_call.1} parent=1 // pred_region
      _
    $region13: #{tpu_custom_call.1} parent=1 // pred_fallthru
      _
    // Predicated region
    $region14: #{tpu_custom_call.1} parent=1 // pred_check
      _
    $region15: #{tpu_custom_call.1} parent=1 // pred_check_branch
      %40 = sbr.rel (0) target = $region17
    $region16: #{tpu_custom_call.1} parent=1 // pred_region
      %s42 = ssub.s32 2048, 2048
      %43 = vsyncadd [#allocation6], %s42
      %s44 = sshll.u32 [#allocation7], 4
      %s45 = int_to_ptr.vmem [resolvable:$true] %s44
      %50 = dma.hbm_to_vmem [thread:$0]  %s3, 2048, %s45, [#allocation6], 64, 64, 4
    $region17: #{tpu_custom_call.1} parent=1 // pred_fallthru
      _
    // Predicated region
    $region18: #{tpu_custom_call.1} parent=1 // pred_check
      _
    $region19: #{tpu_custom_call.1} parent=1 // pred_check_branch
      %52 = sbr.rel (0) target = $region21
    $region20: #{tpu_custom_call.1} parent=1 // pred_region
      _
    $region21: #{tpu_custom_call.1} parent=1 // pred_fallthru
      _
    // Predicated region
    $region22: #{tpu_custom_call.1} parent=1 // pred_check
      _
    $region23: #{tpu_custom_call.1} parent=1 // pred_check_branch
      %54 = sbr.rel (0) target = $region25
    $region24: #{tpu_custom_call.1} parent=1 // pred_region
      %55 = dma.done [#allocation3], 2048
    $region25: #{tpu_custom_call.1} parent=1 // pred_fallthru
      _
    // Predicated region
    $region26: #{tpu_custom_call.1} parent=1 // pred_check
      _
    $region27: #{tpu_custom_call.1} parent=1 // pred_check_branch
      %57 = sbr.rel (0) target = $region29
    $region28: #{tpu_custom_call.1} parent=1 // pred_region
      %58 = dma.done [#allocation6], 16384
    $region29: #{tpu_custom_call.1} parent=1 // pred_fallthru
      _
    // Predicated region
    $region30: #{tpu_custom_call.1} parent=1 // pred_check
      _
    $region31: #{tpu_custom_call.1} parent=1 // pred_check_branch
      %60 = sbr.rel (0) target = $region33
    $region32: #{tpu_custom_call.1} parent=1 // pred_region
      %61 = dma.done [#allocation6], 2048
    $region33: #{tpu_custom_call.1} parent=1 // pred_fallthru
      _
    %v63 = vld [vmem:[#allocation2] sm:$0xff]
    %v64 = vld [vmem:[#allocation2 + $0x8] sm:$0xff]
    %v65 = vld [vmem:[#allocation2 + $0x10] sm:$0xff]
    %v66 = vld [vmem:[#allocation2 + $0x18] sm:$0xff]
    %v67 = vld [vmem:[#allocation2 + $0x20] sm:$0xff]
    %v68 = vld [vmem:[#allocation2 + $0x28] sm:$0xff]
    %v69 = vld [vmem:[#allocation2 + $0x30] sm:$0xff]
    %v70 = vld [vmem:[#allocation2 + $0x38] sm:$0xff]
    %v71 = vld [vmem:[#allocation2 + $0x40] sm:$0xff]
    %v72 = vld [vmem:[#allocation2 + $0x48] sm:$0xff]
    %v73 = vld [vmem:[#allocation2 + $0x50] sm:$0xff]
    %v74 = vld [vmem:[#allocation2 + $0x58] sm:$0xff]
    %v75 = vld [vmem:[#allocation2 + $0x60] sm:$0xff]
    %v76 = vld [vmem:[#allocation2 + $0x68] sm:$0xff]
    %v77 = vld [vmem:[#allocation2 + $0x70] sm:$0xff]
    %v78 = vld [vmem:[#allocation2 + $0x78] sm:$0xff]
    %v79 = vunpack.c.l.s8.bf16 %v63
    %v80 = vunpack.c.l.s8.bf16 %v64
    %v81 = vunpack.c.l.s8.bf16 %v65
    %v82 = vunpack.c.l.s8.bf16 %v66
    %v83 = vunpack.c.l.s8.bf16 %v67
    %v84 = vunpack.c.l.s8.bf16 %v68
    %v85 = vunpack.c.l.s8.bf16 %v69
    %v86 = vunpack.c.l.s8.bf16 %v70
    %v87 = vunpack.c.h.s8.bf16 %v63
    %v88 = vunpack.c.h.s8.bf16 %v64
    %v89 = vunpack.c.h.s8.bf16 %v65
    %v90 = vunpack.c.h.s8.bf16 %v66
    %v91 = vunpack.c.h.s8.bf16 %v67
    %v92 = vunpack.c.h.s8.bf16 %v68
    %v93 = vunpack.c.h.s8.bf16 %v69
    %v94 = vunpack.c.h.s8.bf16 %v70
    %v95 = vunpack.c.l.s8.bf16 %v71
    %v96 = vunpack.c.l.s8.bf16 %v72
    %v97 = vunpack.c.l.s8.bf16 %v73
    %v98 = vunpack.c.l.s8.bf16 %v74
    %v99 = vunpack.c.l.s8.bf16 %v75
    %v100 = vunpack.c.l.s8.bf16 %v76
    %v101 = vunpack.c.l.s8.bf16 %v77
    %v102 = vunpack.c.l.s8.bf16 %v78
    %v103 = vunpack.c.h.s8.bf16 %v71
    %v104 = vunpack.c.h.s8.bf16 %v72
    %v105 = vunpack.c.h.s8.bf16 %v73
    %v106 = vunpack.c.h.s8.bf16 %v74
    %v107 = vunpack.c.h.s8.bf16 %v75
    %v108 = vunpack.c.h.s8.bf16 %v76
    %v109 = vunpack.c.h.s8.bf16 %v77
    %v110 = vunpack.c.h.s8.bf16 %v78
    %v111 = vld [vmem:[#allocation5] sm:$0xff]
    %v112 = vld [vmem:[#allocation5 + $0x8] sm:$0xff]
    %v113 = vld [vmem:[#allocation5 + $0x10] sm:$0xff]
    %v114 = vld [vmem:[#allocation5 + $0x18] sm:$0xff]
    %v115 = vld [vmem:[#allocation5 + $0x20] sm:$0xff]
    %v116 = vld [vmem:[#allocation5 + $0x28] sm:$0xff]
    %v117 = vld [vmem:[#allocation5 + $0x30] sm:$0xff]
    %v118 = vld [vmem:[#allocation5 + $0x38] sm:$0xff]
    %v119 = vld [vmem:[#allocation5 + $0x40] sm:$0xff]
    %v120 = vld [vmem:[#allocation5 + $0x48] sm:$0xff]
    %v121 = vld [vmem:[#allocation5 + $0x50] sm:$0xff]
    %v122 = vld [vmem:[#allocation5 + $0x58] sm:$0xff]
    %v123 = vld [vmem:[#allocation5 + $0x60] sm:$0xff]
    %v124 = vld [vmem:[#allocation5 + $0x68] sm:$0xff]
    %v125 = vld [vmem:[#allocation5 + $0x70] sm:$0xff]
    %v126 = vld [vmem:[#allocation5 + $0x78] sm:$0xff]
    %v127 = vld [vmem:[#allocation5 + $0x80] sm:$0xff]
    %v128 = vld [vmem:[#allocation5 + $0x88] sm:$0xff]
    %v129 = vld [vmem:[#allocation5 + $0x90] sm:$0xff]
    %v130 = vld [vmem:[#allocation5 + $0x98] sm:$0xff]
    %v131 = vld [vmem:[#allocation5 + $0xa0] sm:$0xff]
    %v132 = vld [vmem:[#allocation5 + $0xa8] sm:$0xff]
    %v133 = vld [vmem:[#allocation5 + $0xb0] sm:$0xff]
    %v134 = vld [vmem:[#allocation5 + $0xb8] sm:$0xff]
    %v135 = vld [vmem:[#allocation5 + $0xc0] sm:$0xff]
    %v136 = vld [vmem:[#allocation5 + $0xc8] sm:$0xff]
    %v137 = vld [vmem:[#allocation5 + $0xd0] sm:$0xff]
    %v138 = vld [vmem:[#allocation5 + $0xd8] sm:$0xff]
    %v139 = vld [vmem:[#allocation5 + $0xe0] sm:$0xff]
    %v140 = vld [vmem:[#allocation5 + $0xe8] sm:$0xff]
    %v141 = vld [vmem:[#allocation5 + $0xf0] sm:$0xff]
    %v142 = vld [vmem:[#allocation5 + $0xf8] sm:$0xff]
    %v143 = vld [vmem:[#allocation5 + $0x100] sm:$0xff]
    %v144 = vld [vmem:[#allocation5 + $0x108] sm:$0xff]
    %v145 = vld [vmem:[#allocation5 + $0x110] sm:$0xff]
    %v146 = vld [vmem:[#allocation5 + $0x118] sm:$0xff]
    %v147 = vld [vmem:[#allocation5 + $0x120] sm:$0xff]
    %v148 = vld [vmem:[#allocation5 + $0x128] sm:$0xff]
    %v149 = vld [vmem:[#allocation5 + $0x130] sm:$0xff]
    %v150 = vld [vmem:[#allocation5 + $0x138] sm:$0xff]
    %v151 = vld [vmem:[#allocation5 + $0x140] sm:$0xff]
    %v152 = vld [vmem:[#allocation5 + $0x148] sm:$0xff]
    %v153 = vld [vmem:[#allocation5 + $0x150] sm:$0xff]
    %v154 = vld [vmem:[#allocation5 + $0x158] sm:$0xff]
    %v155 = vld [vmem:[#allocation5 + $0x160] sm:$0xff]
    %v156 = vld [vmem:[#allocation5 + $0x168] sm:$0xff]
    %v157 = vld [vmem:[#allocation5 + $0x170] sm:$0xff]
    %v158 = vld [vmem:[#allocation5 + $0x178] sm:$0xff]
    %v159 = vld [vmem:[#allocation5 + $0x180] sm:$0xff]
    %v160 = vld [vmem:[#allocation5 + $0x188] sm:$0xff]
    %v161 = vld [vmem:[#allocation5 + $0x190] sm:$0xff]
    %v162 = vld [vmem:[#allocation5 + $0x198] sm:$0xff]
    %v163 = vld [vmem:[#allocation5 + $0x1a0] sm:$0xff]
    %v164 = vld [vmem:[#allocation5 + $0x1a8] sm:$0xff]
    %v165 = vld [vmem:[#allocation5 + $0x1b0] sm:$0xff]
    %v166 = vld [vmem:[#allocation5 + $0x1b8] sm:$0xff]
    %v167 = vld [vmem:[#allocation5 + $0x1c0] sm:$0xff]
    %v168 = vld [vmem:[#allocation5 + $0x1c8] sm:$0xff]
    %v169 = vld [vmem:[#allocation5 + $0x1d0] sm:$0xff]
    %v170 = vld [vmem:[#allocation5 + $0x1d8] sm:$0xff]
    %v171 = vld [vmem:[#allocation5 + $0x1e0] sm:$0xff]
    %v172 = vld [vmem:[#allocation5 + $0x1e8] sm:$0xff]
    %v173 = vld [vmem:[#allocation5 + $0x1f0] sm:$0xff]
    %v174 = vld [vmem:[#allocation5 + $0x1f8] sm:$0xff]
    %v175 = vld [vmem:[#allocation5 + $0x200] sm:$0xff]
    %v176 = vld [vmem:[#allocation5 + $0x208] sm:$0xff]
    %v177 = vld [vmem:[#allocation5 + $0x210] sm:$0xff]
    %v178 = vld [vmem:[#allocation5 + $0x218] sm:$0xff]
    %v179 = vld [vmem:[#allocation5 + $0x220] sm:$0xff]
    %v180 = vld [vmem:[#allocation5 + $0x228] sm:$0xff]
    %v181 = vld [vmem:[#allocation5 + $0x230] sm:$0xff]
    %v182 = vld [vmem:[#allocation5 + $0x238] sm:$0xff]
    %v183 = vld [vmem:[#allocation5 + $0x240] sm:$0xff]
    %v184 = vld [vmem:[#allocation5 + $0x248] sm:$0xff]
    %v185 = vld [vmem:[#allocation5 + $0x250] sm:$0xff]
    %v186 = vld [vmem:[#allocation5 + $0x258] sm:$0xff]
    %v187 = vld [vmem:[#allocation5 + $0x260] sm:$0xff]
    %v188 = vld [vmem:[#allocation5 + $0x268] sm:$0xff]
    %v189 = vld [vmem:[#allocation5 + $0x270] sm:$0xff]
    %v190 = vld [vmem:[#allocation5 + $0x278] sm:$0xff]
    %v191 = vld [vmem:[#allocation5 + $0x280] sm:$0xff]
    %v192 = vld [vmem:[#allocation5 + $0x288] sm:$0xff]
    %v193 = vld [vmem:[#allocation5 + $0x290] sm:$0xff]
    %v194 = vld [vmem:[#allocation5 + $0x298] sm:$0xff]
    %v195 = vld [vmem:[#allocation5 + $0x2a0] sm:$0xff]
    %v196 = vld [vmem:[#allocation5 + $0x2a8] sm:$0xff]
    %v197 = vld [vmem:[#allocation5 + $0x2b0] sm:$0xff]
    %v198 = vld [vmem:[#allocation5 + $0x2b8] sm:$0xff]
    %v199 = vld [vmem:[#allocation5 + $0x2c0] sm:$0xff]
    %v200 = vld [vmem:[#allocation5 + $0x2c8] sm:$0xff]
    %v201 = vld [vmem:[#allocation5 + $0x2d0] sm:$0xff]
    %v202 = vld [vmem:[#allocation5 + $0x2d8] sm:$0xff]
    %v203 = vld [vmem:[#allocation5 + $0x2e0] sm:$0xff]
    %v204 = vld [vmem:[#allocation5 + $0x2e8] sm:$0xff]
    %v205 = vld [vmem:[#allocation5 + $0x2f0] sm:$0xff]
    %v206 = vld [vmem:[#allocation5 + $0x2f8] sm:$0xff]
    %v207 = vld [vmem:[#allocation5 + $0x300] sm:$0xff]
    %v208 = vld [vmem:[#allocation5 + $0x308] sm:$0xff]
    %v209 = vld [vmem:[#allocation5 + $0x310] sm:$0xff]
    %v210 = vld [vmem:[#allocation5 + $0x318] sm:$0xff]
    %v211 = vld [vmem:[#allocation5 + $0x320] sm:$0xff]
    %v212 = vld [vmem:[#allocation5 + $0x328] sm:$0xff]
    %v213 = vld [vmem:[#allocation5 + $0x330] sm:$0xff]
    %v214 = vld [vmem:[#allocation5 + $0x338] sm:$0xff]
    %v215 = vld [vmem:[#allocation5 + $0x340] sm:$0xff]
    %v216 = vld [vmem:[#allocation5 + $0x348] sm:$0xff]
    %v217 = vld [vmem:[#allocation5 + $0x350] sm:$0xff]
    %v218 = vld [vmem:[#allocation5 + $0x358] sm:$0xff]
    %v219 = vld [vmem:[#allocation5 + $0x360] sm:$0xff]
    %v220 = vld [vmem:[#allocation5 + $0x368] sm:$0xff]
    %v221 = vld [vmem:[#allocation5 + $0x370] sm:$0xff]
    %v222 = vld [vmem:[#allocation5 + $0x378] sm:$0xff]
    %v223 = vld [vmem:[#allocation5 + $0x380] sm:$0xff]
    %v224 = vld [vmem:[#allocation5 + $0x388] sm:$0xff]
    %v225 = vld [vmem:[#allocation5 + $0x390] sm:$0xff]
    %v226 = vld [vmem:[#allocation5 + $0x398] sm:$0xff]
    %v227 = vld [vmem:[#allocation5 + $0x3a0] sm:$0xff]
    %v228 = vld [vmem:[#allocation5 + $0x3a8] sm:$0xff]
    %v229 = vld [vmem:[#allocation5 + $0x3b0] sm:$0xff]
    %v230 = vld [vmem:[#allocation5 + $0x3b8] sm:$0xff]
    %v231 = vld [vmem:[#allocation5 + $0x3c0] sm:$0xff]
    %v232 = vld [vmem:[#allocation5 + $0x3c8] sm:$0xff]
    %v233 = vld [vmem:[#allocation5 + $0x3d0] sm:$0xff]
    %v234 = vld [vmem:[#allocation5 + $0x3d8] sm:$0xff]
    %v235 = vld [vmem:[#allocation5 + $0x3e0] sm:$0xff]
    %v236 = vld [vmem:[#allocation5 + $0x3e8] sm:$0xff]
    %v237 = vld [vmem:[#allocation5 + $0x3f0] sm:$0xff]
    %v238 = vld [vmem:[#allocation5 + $0x3f8] sm:$0xff]
    %v239 = vld [vmem:[%s2] sm:$0x3]
    %v241 = vlaneseq
    %v242 = vshrl.u32 %v241, 7
    %v243 = vsub.s32 0, %v242
    %v244 = vrot.slane %v239, %v243
    %v245 = vlaneseq
    %v246 = vshrl.u32 %v245, 7
    %v247 = vsub.s32 1, %v246
    %v248 = vrot.slane %v239, %v247
    %v379 = vunpack.c.l.b16 %v111
    %v380 = vunpack.c.h.b16 %v111
    %v381 = vunpack.c.l.b16 %v112
    %v382 = vunpack.c.h.b16 %v112
    %v383 = vunpack.c.l.b16 %v113
    %v384 = vunpack.c.h.b16 %v113
    %v385 = vunpack.c.l.b16 %v114
    %v386 = vunpack.c.h.b16 %v114
    %v387 = vunpack.c.l.b16 %v115
    %v388 = vunpack.c.h.b16 %v115
    %v389 = vunpack.c.l.b16 %v116
    %v390 = vunpack.c.h.b16 %v116
    %v391 = vunpack.c.l.b16 %v117
    %v392 = vunpack.c.h.b16 %v117
    %v393 = vunpack.c.l.b16 %v118
    %v394 = vunpack.c.h.b16 %v118
    %v395 = vunpack.c.l.b16 %v119
    %v396 = vunpack.c.h.b16 %v119
    %v397 = vunpack.c.l.b16 %v120
    %v398 = vunpack.c.h.b16 %v120
    %v399 = vunpack.c.l.b16 %v121
    %v400 = vunpack.c.h.b16 %v121
    %v401 = vunpack.c.l.b16 %v122
    %v402 = vunpack.c.h.b16 %v122
    %v403 = vunpack.c.l.b16 %v123
    %v404 = vunpack.c.h.b16 %v123
    %v405 = vunpack.c.l.b16 %v124
    %v406 = vunpack.c.h.b16 %v124
    %v407 = vunpack.c.l.b16 %v125
    %v408 = vunpack.c.h.b16 %v125
    %v409 = vunpack.c.l.b16 %v126
    %v410 = vunpack.c.h.b16 %v126
    %v411 = vunpack.c.l.b16 %v127
    %v412 = vunpack.c.h.b16 %v127
    %v413 = vunpack.c.l.b16 %v128
    %v414 = vunpack.c.h.b16 %v128
    %v415 = vunpack.c.l.b16 %v129
    %v416 = vunpack.c.h.b16 %v129
    %v417 = vunpack.c.l.b16 %v130
    %v418 = vunpack.c.h.b16 %v130
    %v419 = vunpack.c.l.b16 %v131
    %v420 = vunpack.c.h.b16 %v131
    %v421 = vunpack.c.l.b16 %v132
    %v422 = vunpack.c.h.b16 %v132
    %v423 = vunpack.c.l.b16 %v133
    %v424 = vunpack.c.h.b16 %v133
    %v425 = vunpack.c.l.b16 %v134
    %v426 = vunpack.c.h.b16 %v134
    %v427 = vunpack.c.l.b16 %v135
    %v428 = vunpack.c.h.b16 %v135
    %v429 = vunpack.c.l.b16 %v136
    %v430 = vunpack.c.h.b16 %v136
    %v431 = vunpack.c.l.b16 %v137
    %v432 = vunpack.c.h.b16 %v137
    %v433 = vunpack.c.l.b16 %v138
    %v434 = vunpack.c.h.b16 %v138
    %v435 = vunpack.c.l.b16 %v139
    %v436 = vunpack.c.h.b16 %v139
    %v437 = vunpack.c.l.b16 %v140
    %v438 = vunpack.c.h.b16 %v140
    %v439 = vunpack.c.l.b16 %v141
    %v440 = vunpack.c.h.b16 %v141
    %v441 = vunpack.c.l.b16 %v142
    %v442 = vunpack.c.h.b16 %v142
    %v443 = vunpack.c.l.b16 %v143
    %v444 = vunpack.c.h.b16 %v143
    %v445 = vunpack.c.l.b16 %v144
    %v446 = vunpack.c.h.b16 %v144
    %v447 = vunpack.c.l.b16 %v145
    %v448 = vunpack.c.h.b16 %v145
    %v449 = vunpack.c.l.b16 %v146
    %v450 = vunpack.c.h.b16 %v146
    %v451 = vunpack.c.l.b16 %v147
    %v452 = vunpack.c.h.b16 %v147
    %v453 = vunpack.c.l.b16 %v148
    %v454 = vunpack.c.h.b16 %v148
    %v455 = vunpack.c.l.b16 %v149
    %v456 = vunpack.c.h.b16 %v149
    %v457 = vunpack.c.l.b16 %v150
    %v458 = vunpack.c.h.b16 %v150
    %v459 = vunpack.c.l.b16 %v151
    %v460 = vunpack.c.h.b16 %v151
    %v461 = vunpack.c.l.b16 %v152
    %v462 = vunpack.c.h.b16 %v152
    %v463 = vunpack.c.l.b16 %v153
    %v464 = vunpack.c.h.b16 %v153
    %v465 = vunpack.c.l.b16 %v154
    %v466 = vunpack.c.h.b16 %v154
    %v467 = vunpack.c.l.b16 %v155
    %v468 = vunpack.c.h.b16 %v155
    %v469 = vunpack.c.l.b16 %v156
    %v470 = vunpack.c.h.b16 %v156
    %v471 = vunpack.c.l.b16 %v157
    %v472 = vunpack.c.h.b16 %v157
    %v473 = vunpack.c.l.b16 %v158
    %v474 = vunpack.c.h.b16 %v158
    %v475 = vunpack.c.l.b16 %v159
    %v476 = vunpack.c.h.b16 %v159
    %v477 = vunpack.c.l.b16 %v160
    %v478 = vunpack.c.h.b16 %v160
    %v479 = vunpack.c.l.b16 %v161
    %v480 = vunpack.c.h.b16 %v161
    %v481 = vunpack.c.l.b16 %v162
    %v482 = vunpack.c.h.b16 %v162
    %v483 = vunpack.c.l.b16 %v163
    %v484 = vunpack.c.h.b16 %v163
    %v485 = vunpack.c.l.b16 %v164
    %v486 = vunpack.c.h.b16 %v164
    %v487 = vunpack.c.l.b16 %v165
    %v488 = vunpack.c.h.b16 %v165
    %v489 = vunpack.c.l.b16 %v166
    %v490 = vunpack.c.h.b16 %v166
    %v491 = vunpack.c.l.b16 %v167
    %v492 = vunpack.c.h.b16 %v167
    %v493 = vunpack.c.l.b16 %v168
    %v494 = vunpack.c.h.b16 %v168
    %v495 = vunpack.c.l.b16 %v169
    %v496 = vunpack.c.h.b16 %v169
    %v497 = vunpack.c.l.b16 %v170
    %v498 = vunpack.c.h.b16 %v170
    %v499 = vunpack.c.l.b16 %v171
    %v500 = vunpack.c.h.b16 %v171
    %v501 = vunpack.c.l.b16 %v172
    %v502 = vunpack.c.h.b16 %v172
    %v503 = vunpack.c.l.b16 %v173
    %v504 = vunpack.c.h.b16 %v173
    %v505 = vunpack.c.l.b16 %v174
    %v506 = vunpack.c.h.b16 %v174
    %v507 = vunpack.c.l.b16 %v175
    %v508 = vunpack.c.h.b16 %v175
    %v509 = vunpack.c.l.b16 %v176
    %v510 = vunpack.c.h.b16 %v176
    %v511 = vunpack.c.l.b16 %v177
    %v512 = vunpack.c.h.b16 %v177
    %v513 = vunpack.c.l.b16 %v178
    %v514 = vunpack.c.h.b16 %v178
    %v515 = vunpack.c.l.b16 %v179
    %v516 = vunpack.c.h.b16 %v179
    %v517 = vunpack.c.l.b16 %v180
    %v518 = vunpack.c.h.b16 %v180
    %v519 = vunpack.c.l.b16 %v181
    %v520 = vunpack.c.h.b16 %v181
    %v521 = vunpack.c.l.b16 %v182
    %v522 = vunpack.c.h.b16 %v182
    %v523 = vunpack.c.l.b16 %v183
    %v524 = vunpack.c.h.b16 %v183
    %v525 = vunpack.c.l.b16 %v184
    %v526 = vunpack.c.h.b16 %v184
    %v527 = vunpack.c.l.b16 %v185
    %v528 = vunpack.c.h.b16 %v185
    %v529 = vunpack.c.l.b16 %v186
    %v530 = vunpack.c.h.b16 %v186
    %v531 = vunpack.c.l.b16 %v187
    %v532 = vunpack.c.h.b16 %v187
    %v533 = vunpack.c.l.b16 %v188
    %v534 = vunpack.c.h.b16 %v188
    %v535 = vunpack.c.l.b16 %v189
    %v536 = vunpack.c.h.b16 %v189
    %v537 = vunpack.c.l.b16 %v190
    %v538 = vunpack.c.h.b16 %v190
    %v539 = vunpack.c.l.b16 %v191
    %v540 = vunpack.c.h.b16 %v191
    %v541 = vunpack.c.l.b16 %v192
    %v542 = vunpack.c.h.b16 %v192
    %v543 = vunpack.c.l.b16 %v193
    %v544 = vunpack.c.h.b16 %v193
    %v545 = vunpack.c.l.b16 %v194
    %v546 = vunpack.c.h.b16 %v194
    %v547 = vunpack.c.l.b16 %v195
    %v548 = vunpack.c.h.b16 %v195
    %v549 = vunpack.c.l.b16 %v196
    %v550 = vunpack.c.h.b16 %v196
    %v551 = vunpack.c.l.b16 %v197
    %v552 = vunpack.c.h.b16 %v197
    %v553 = vunpack.c.l.b16 %v198
    %v554 = vunpack.c.h.b16 %v198
    %v555 = vunpack.c.l.b16 %v199
    %v556 = vunpack.c.h.b16 %v199
    %v557 = vunpack.c.l.b16 %v200
    %v558 = vunpack.c.h.b16 %v200
    %v559 = vunpack.c.l.b16 %v201
    %v560 = vunpack.c.h.b16 %v201
    %v561 = vunpack.c.l.b16 %v202
    %v562 = vunpack.c.h.b16 %v202
    %v563 = vunpack.c.l.b16 %v203
    %v564 = vunpack.c.h.b16 %v203
    %v565 = vunpack.c.l.b16 %v204
    %v566 = vunpack.c.h.b16 %v204
    %v567 = vunpack.c.l.b16 %v205
    %v568 = vunpack.c.h.b16 %v205
    %v569 = vunpack.c.l.b16 %v206
    %v570 = vunpack.c.h.b16 %v206
    %v571 = vunpack.c.l.b16 %v207
    %v572 = vunpack.c.h.b16 %v207
    %v573 = vunpack.c.l.b16 %v208
    %v574 = vunpack.c.h.b16 %v208
    %v575 = vunpack.c.l.b16 %v209
    %v576 = vunpack.c.h.b16 %v209
    %v577 = vunpack.c.l.b16 %v210
    %v578 = vunpack.c.h.b16 %v210
    %v579 = vunpack.c.l.b16 %v211
    %v580 = vunpack.c.h.b16 %v211
    %v581 = vunpack.c.l.b16 %v212
    %v582 = vunpack.c.h.b16 %v212
    %v583 = vunpack.c.l.b16 %v213
    %v584 = vunpack.c.h.b16 %v213
    %v585 = vunpack.c.l.b16 %v214
    %v586 = vunpack.c.h.b16 %v214
    %v587 = vunpack.c.l.b16 %v215
    %v588 = vunpack.c.h.b16 %v215
    %v589 = vunpack.c.l.b16 %v216
    %v590 = vunpack.c.h.b16 %v216
    %v591 = vunpack.c.l.b16 %v217
    %v592 = vunpack.c.h.b16 %v217
    %v593 = vunpack.c.l.b16 %v218
    %v594 = vunpack.c.h.b16 %v218
    %v595 = vunpack.c.l.b16 %v219
    %v596 = vunpack.c.h.b16 %v219
    %v597 = vunpack.c.l.b16 %v220
    %v598 = vunpack.c.h.b16 %v220
    %v599 = vunpack.c.l.b16 %v221
    %v600 = vunpack.c.h.b16 %v221
    %v601 = vunpack.c.l.b16 %v222
    %v602 = vunpack.c.h.b16 %v222
    %v603 = vunpack.c.l.b16 %v223
    %v604 = vunpack.c.h.b16 %v223
    %v605 = vunpack.c.l.b16 %v224
    %v606 = vunpack.c.h.b16 %v224
    %v607 = vunpack.c.l.b16 %v225
    %v608 = vunpack.c.h.b16 %v225
    %v609 = vunpack.c.l.b16 %v226
    %v610 = vunpack.c.h.b16 %v226
    %v611 = vunpack.c.l.b16 %v227
    %v612 = vunpack.c.h.b16 %v227
    %v613 = vunpack.c.l.b16 %v228
    %v614 = vunpack.c.h.b16 %v228
    %v615 = vunpack.c.l.b16 %v229
    %v616 = vunpack.c.h.b16 %v229
    %v617 = vunpack.c.l.b16 %v230
    %v618 = vunpack.c.h.b16 %v230
    %v619 = vunpack.c.l.b16 %v231
    %v620 = vunpack.c.h.b16 %v231
    %v621 = vunpack.c.l.b16 %v232
    %v622 = vunpack.c.h.b16 %v232
    %v623 = vunpack.c.l.b16 %v233
    %v624 = vunpack.c.h.b16 %v233
    %v625 = vunpack.c.l.b16 %v234
    %v626 = vunpack.c.h.b16 %v234
    %v627 = vunpack.c.l.b16 %v235
    %v628 = vunpack.c.h.b16 %v235
    %v629 = vunpack.c.l.b16 %v236
    %v630 = vunpack.c.h.b16 %v236
    %v631 = vunpack.c.l.b16 %v237
    %v632 = vunpack.c.h.b16 %v237
    %v633 = vunpack.c.l.b16 %v238
    %v634 = vunpack.c.h.b16 %v238
    %v635 = vpack.c.b16 %v381, %v379
    %v636 = vpack.c.b16 %v382, %v380
    %v637 = vpack.c.b16 %v385, %v383
    %v638 = vpack.c.b16 %v386, %v384
    %v639 = vpack.c.b16 %v389, %v387
    %v640 = vpack.c.b16 %v390, %v388
    %v641 = vpack.c.b16 %v393, %v391
    %v642 = vpack.c.b16 %v394, %v392
    %v643 = vpack.c.b16 %v397, %v395
    %v644 = vpack.c.b16 %v398, %v396
    %v645 = vpack.c.b16 %v401, %v399
    %v646 = vpack.c.b16 %v402, %v400
    %v647 = vpack.c.b16 %v405, %v403
    %v648 = vpack.c.b16 %v406, %v404
    %v649 = vpack.c.b16 %v409, %v407
    %v650 = vpack.c.b16 %v410, %v408
    %v651 = vpack.c.b16 %v413, %v411
    %v652 = vpack.c.b16 %v414, %v412
    %v653 = vpack.c.b16 %v417, %v415
    %v654 = vpack.c.b16 %v418, %v416
    %v655 = vpack.c.b16 %v421, %v419
    %v656 = vpack.c.b16 %v422, %v420
    %v657 = vpack.c.b16 %v425, %v423
    %v658 = vpack.c.b16 %v426, %v424
    %v659 = vpack.c.b16 %v429, %v427
    %v660 = vpack.c.b16 %v430, %v428
    %v661 = vpack.c.b16 %v433, %v431
    %v662 = vpack.c.b16 %v434, %v432
    %v663 = vpack.c.b16 %v437, %v435
    %v664 = vpack.c.b16 %v438, %v436
    %v665 = vpack.c.b16 %v441, %v439
    %v666 = vpack.c.b16 %v442, %v440
    %v667 = vpack.c.b16 %v445, %v443
    %v668 = vpack.c.b16 %v446, %v444
    %v669 = vpack.c.b16 %v449, %v447
    %v670 = vpack.c.b16 %v450, %v448
    %v671 = vpack.c.b16 %v453, %v451
    %v672 = vpack.c.b16 %v454, %v452
    %v673 = vpack.c.b16 %v457, %v455
    %v674 = vpack.c.b16 %v458, %v456
    %v675 = vpack.c.b16 %v461, %v459
    %v676 = vpack.c.b16 %v462, %v460
    %v677 = vpack.c.b16 %v465, %v463
    %v678 = vpack.c.b16 %v466, %v464
    %v679 = vpack.c.b16 %v469, %v467
    %v680 = vpack.c.b16 %v470, %v468
    %v681 = vpack.c.b16 %v473, %v471
    %v682 = vpack.c.b16 %v474, %v472
    %v683 = vpack.c.b16 %v477, %v475
    %v684 = vpack.c.b16 %v478, %v476
    %v685 = vpack.c.b16 %v481, %v479
    %v686 = vpack.c.b16 %v482, %v480
    %v687 = vpack.c.b16 %v485, %v483
    %v688 = vpack.c.b16 %v486, %v484
    %v689 = vpack.c.b16 %v489, %v487
    %v690 = vpack.c.b16 %v490, %v488
    %v691 = vpack.c.b16 %v493, %v491
    %v692 = vpack.c.b16 %v494, %v492
    %v693 = vpack.c.b16 %v497, %v495
    %v694 = vpack.c.b16 %v498, %v496
    %v695 = vpack.c.b16 %v501, %v499
    %v696 = vpack.c.b16 %v502, %v500
    %v697 = vpack.c.b16 %v505, %v503
    %v698 = vpack.c.b16 %v506, %v504
    %v699 = vpack.c.b16 %v509, %v507
    %v700 = vpack.c.b16 %v510, %v508
    %v701 = vpack.c.b16 %v513, %v511
    %v702 = vpack.c.b16 %v514, %v512
    %v703 = vpack.c.b16 %v517, %v515
    %v704 = vpack.c.b16 %v518, %v516
    %v705 = vpack.c.b16 %v521, %v519
    %v706 = vpack.c.b16 %v522, %v520
    %v707 = vpack.c.b16 %v525, %v523
    %v708 = vpack.c.b16 %v526, %v524
    %v709 = vpack.c.b16 %v529, %v527
    %v710 = vpack.c.b16 %v530, %v528
    %v711 = vpack.c.b16 %v533, %v531
    %v712 = vpack.c.b16 %v534, %v532
    %v713 = vpack.c.b16 %v537, %v535
    %v714 = vpack.c.b16 %v538, %v536
    %v715 = vpack.c.b16 %v541, %v539
    %v716 = vpack.c.b16 %v542, %v540
    %v717 = vpack.c.b16 %v545, %v543
    %v718 = vpack.c.b16 %v546, %v544
    %v719 = vpack.c.b16 %v549, %v547
    %v720 = vpack.c.b16 %v550, %v548
    %v721 = vpack.c.b16 %v553, %v551
    %v722 = vpack.c.b16 %v554, %v552
    %v723 = vpack.c.b16 %v557, %v555
    %v724 = vpack.c.b16 %v558, %v556
    %v725 = vpack.c.b16 %v561, %v559
    %v726 = vpack.c.b16 %v562, %v560
    %v727 = vpack.c.b16 %v565, %v563
    %v728 = vpack.c.b16 %v566, %v564
    %v729 = vpack.c.b16 %v569, %v567
    %v730 = vpack.c.b16 %v570, %v568
    %v731 = vpack.c.b16 %v573, %v571
    %v732 = vpack.c.b16 %v574, %v572
    %v733 = vpack.c.b16 %v577, %v575
    %v734 = vpack.c.b16 %v578, %v576
    %v735 = vpack.c.b16 %v581, %v579
    %v736 = vpack.c.b16 %v582, %v580
    %v737 = vpack.c.b16 %v585, %v583
    %v738 = vpack.c.b16 %v586, %v584
    %v739 = vpack.c.b16 %v589, %v587
    %v740 = vpack.c.b16 %v590, %v588
    %v741 = vpack.c.b16 %v593, %v591
    %v742 = vpack.c.b16 %v594, %v592
    %v743 = vpack.c.b16 %v597, %v595
    %v744 = vpack.c.b16 %v598, %v596
    %v745 = vpack.c.b16 %v601, %v599
    %v746 = vpack.c.b16 %v602, %v600
    %v747 = vpack.c.b16 %v605, %v603
    %v748 = vpack.c.b16 %v606, %v604
    %v749 = vpack.c.b16 %v609, %v607
    %v750 = vpack.c.b16 %v610, %v608
    %v751 = vpack.c.b16 %v613, %v611
    %v752 = vpack.c.b16 %v614, %v612
    %v753 = vpack.c.b16 %v617, %v615
    %v754 = vpack.c.b16 %v618, %v616
    %v755 = vpack.c.b16 %v621, %v619
    %v756 = vpack.c.b16 %v622, %v620
    %v757 = vpack.c.b16 %v625, %v623
    %v758 = vpack.c.b16 %v626, %v624
    %v759 = vpack.c.b16 %v629, %v627
    %v760 = vpack.c.b16 %v630, %v628
    %v761 = vpack.c.b16 %v633, %v631
    %v762 = vpack.c.b16 %v634, %v632
    %891 = vmatprep.subr.bf16.mxu0 %v650
    %892 = vmatpush1.bf16.msra.mxu0 %v649
    %893 = vmatprep.subr.bf16.mxu0 %v648
    %894 = vmatpush1.bf16.msra.mxu0 %v647
    %895 = vmatprep.subr.bf16.mxu0 %v646
    %896 = vmatpush1.bf16.msra.mxu0 %v645
    %897 = vmatprep.subr.bf16.mxu0 %v644
    %898 = vmatpush1.bf16.msra.mxu0 %v643
    %899 = vmatprep.subr.bf16.mxu0 %v642
    %900 = vmatpush1.bf16.msra.mxu0 %v641
    %901 = vmatprep.subr.bf16.mxu0 %v640
    %902 = vmatpush1.bf16.msra.mxu0 %v639
    %903 = vmatprep.subr.bf16.mxu0 %v638
    %904 = vmatpush1.bf16.msra.mxu0 %v637
    %905 = vmatprep.subr.bf16.mxu0 %v636
    %906 = vmatpush1.bf16.msra.mxu0 %v635
    %907 = vmatprep.subr.bf16.mxu0 %v666
    %908 = vmatpush2.bf16.msra.mxu0 %v665
    %909 = vmatprep.subr.bf16.mxu0 %v664
    %910 = vmatpush2.bf16.msra.mxu0 %v663
    %911 = vmatprep.subr.bf16.mxu0 %v662
    %912 = vmatpush2.bf16.msra.mxu0 %v661
    %913 = vmatprep.subr.bf16.mxu0 %v660
    %914 = vmatpush2.bf16.msra.mxu0 %v659
    %915 = vmatprep.subr.bf16.mxu0 %v658
    %916 = vmatpush2.bf16.msra.mxu0 %v657
    %917 = vmatprep.subr.bf16.mxu0 %v656
    %918 = vmatpush2.bf16.msra.mxu0 %v655
    %919 = vmatprep.subr.bf16.mxu0 %v654
    %920 = vmatpush2.bf16.msra.mxu0 %v653
    %921 = vmatprep.subr.bf16.mxu0 %v652
    %922 = vmatpush2.bf16.msra.mxu0 %v651
    %923 = vmatprep.mubr.bf16.mxu0 %v80
    %924 = vmatmul.mubr.bf16.gmra.mxu0 %v79
    %v925 = vpop.f32.mrf.mxu0
    %v926 = vadd.f32 %v244, %v925
    %v927 = vpop.f32.mrf.mxu0
    %v928 = vadd.f32 %v248, %v927
    %v929 = vpop.f32.mrf.mxu0
    %v930 = vadd.f32 %v244, %v929
    %v931 = vpop.f32.mrf.mxu0
    %v932 = vadd.f32 %v248, %v931
    %933 = vmatprep.mubr.bf16.mxu0 %v88
    %934 = vmatmul.mubr.bf16.gmra.mxu0 %v87
    %v935 = vpop.f32.mrf.mxu0
    %v936 = vadd.f32 %v244, %v935
    %v937 = vpop.f32.mrf.mxu0
    %v938 = vadd.f32 %v248, %v937
    %v939 = vpop.f32.mrf.mxu0
    %v940 = vadd.f32 %v244, %v939
    %v941 = vpop.f32.mrf.mxu0
    %v942 = vadd.f32 %v248, %v941
    %943 = vmatprep.mubr.bf16.mxu0 %v96
    %944 = vmatmul.mubr.bf16.gmra.mxu0 %v95
    %v945 = vpop.f32.mrf.mxu0
    %v946 = vadd.f32 %v244, %v945
    %v947 = vpop.f32.mrf.mxu0
    %v948 = vadd.f32 %v248, %v947
    %v949 = vpop.f32.mrf.mxu0
    %v950 = vadd.f32 %v244, %v949
    %v951 = vpop.f32.mrf.mxu0
    %v952 = vadd.f32 %v248, %v951
    %953 = vmatprep.mubr.bf16.mxu0 %v104
    %954 = vmatmul.mubr.bf16.gmra.mxu0 %v103
    %v955 = vpop.f32.mrf.mxu0
    %v956 = vadd.f32 %v244, %v955
    %v957 = vpop.f32.mrf.mxu0
    %v958 = vadd.f32 %v248, %v957
    %v959 = vpop.f32.mrf.mxu0
    %v960 = vadd.f32 %v244, %v959
    %v961 = vpop.f32.mrf.mxu0
    %v962 = vadd.f32 %v248, %v961
    %963 = vdwg.mxu0
    %964 = vmatprep.subr.bf16.mxu0 %v682
    %965 = vmatpush1.bf16.msra.mxu0 %v681
    %966 = vmatprep.subr.bf16.mxu0 %v680
    %967 = vmatpush1.bf16.msra.mxu0 %v679
    %968 = vmatprep.subr.bf16.mxu0 %v678
    %969 = vmatpush1.bf16.msra.mxu0 %v677
    %970 = vmatprep.subr.bf16.mxu0 %v676
    %971 = vmatpush1.bf16.msra.mxu0 %v675
    %972 = vmatprep.subr.bf16.mxu0 %v674
    %973 = vmatpush1.bf16.msra.mxu0 %v673
    %974 = vmatprep.subr.bf16.mxu0 %v672
    %975 = vmatpush1.bf16.msra.mxu0 %v671
    %976 = vmatprep.subr.bf16.mxu0 %v670
    %977 = vmatpush1.bf16.msra.mxu0 %v669
    %978 = vmatprep.subr.bf16.mxu0 %v668
    %979 = vmatpush1.bf16.msra.mxu0 %v667
    %980 = vmatprep.subr.bf16.mxu0 %v698
    %981 = vmatpush2.bf16.msra.mxu0 %v697
    %982 = vmatprep.subr.bf16.mxu0 %v696
    %983 = vmatpush2.bf16.msra.mxu0 %v695
    %984 = vmatprep.subr.bf16.mxu0 %v694
    %985 = vmatpush2.bf16.msra.mxu0 %v693
    %986 = vmatprep.subr.bf16.mxu0 %v692
    %987 = vmatpush2.bf16.msra.mxu0 %v691
    %988 = vmatprep.subr.bf16.mxu0 %v690
    %989 = vmatpush2.bf16.msra.mxu0 %v689
    %990 = vmatprep.subr.bf16.mxu0 %v688
    %991 = vmatpush2.bf16.msra.mxu0 %v687
    %992 = vmatprep.subr.bf16.mxu0 %v686
    %993 = vmatpush2.bf16.msra.mxu0 %v685
    %994 = vmatprep.subr.bf16.mxu0 %v684
    %995 = vmatpush2.bf16.msra.mxu0 %v683
    %996 = vmatprep.mubr.bf16.mxu0 %v82
    %997 = vmatmul.mubr.bf16.gmra.mxu0 %v81
    %v998 = vpop.f32.mrf.mxu0
    %v999 = vadd.f32 %v926, %v998
    %v1000 = vpop.f32.mrf.mxu0
    %v1001 = vadd.f32 %v928, %v1000
    %v1002 = vpop.f32.mrf.mxu0
    %v1003 = vadd.f32 %v930, %v1002
    %v1004 = vpop.f32.mrf.mxu0
    %v1005 = vadd.f32 %v932, %v1004
    %1006 = vmatprep.mubr.bf16.mxu0 %v90
    %1007 = vmatmul.mubr.bf16.gmra.mxu0 %v89
    %v1008 = vpop.f32.mrf.mxu0
    %v1009 = vadd.f32 %v936, %v1008
    %v1010 = vpop.f32.mrf.mxu0
    %v1011 = vadd.f32 %v938, %v1010
    %v1012 = vpop.f32.mrf.mxu0
    %v1013 = vadd.f32 %v940, %v1012
    %v1014 = vpop.f32.mrf.mxu0
    %v1015 = vadd.f32 %v942, %v1014
    %1016 = vmatprep.mubr.bf16.mxu0 %v98
    %1017 = vmatmul.mubr.bf16.gmra.mxu0 %v97
    %v1018 = vpop.f32.mrf.mxu0
    %v1019 = vadd.f32 %v946, %v1018
    %v1020 = vpop.f32.mrf.mxu0
    %v1021 = vadd.f32 %v948, %v1020
    %v1022 = vpop.f32.mrf.mxu0
    %v1023 = vadd.f32 %v950, %v1022
    %v1024 = vpop.f32.mrf.mxu0
    %v1025 = vadd.f32 %v952, %v1024
    %1026 = vmatprep.mubr.bf16.mxu0 %v106
    %1027 = vmatmul.mubr.bf16.gmra.mxu0 %v105
    %v1028 = vpop.f32.mrf.mxu0
    %v1029 = vadd.f32 %v956, %v1028
    %v1030 = vpop.f32.mrf.mxu0
    %v1031 = vadd.f32 %v958, %v1030
    %v1032 = vpop.f32.mrf.mxu0
    %v1033 = vadd.f32 %v960, %v1032
    %v1034 = vpop.f32.mrf.mxu0
    %v1035 = vadd.f32 %v962, %v1034
    %1036 = vdwg.mxu0
    %1037 = vmatprep.subr.bf16.mxu0 %v714
    %1038 = vmatpush1.bf16.msra.mxu0 %v713
    %1039 = vmatprep.subr.bf16.mxu0 %v712
    %1040 = vmatpush1.bf16.msra.mxu0 %v711
    %1041 = vmatprep.subr.bf16.mxu0 %v710
    %1042 = vmatpush1.bf16.msra.mxu0 %v709
    %1043 = vmatprep.subr.bf16.mxu0 %v708
    %1044 = vmatpush1.bf16.msra.mxu0 %v707
    %1045 = vmatprep.subr.bf16.mxu0 %v706
    %1046 = vmatpush1.bf16.msra.mxu0 %v705
    %1047 = vmatprep.subr.bf16.mxu0 %v704
    %1048 = vmatpush1.bf16.msra.mxu0 %v703
    %1049 = vmatprep.subr.bf16.mxu0 %v702
    %1050 = vmatpush1.bf16.msra.mxu0 %v701
    %1051 = vmatprep.subr.bf16.mxu0 %v700
    %1052 = vmatpush1.bf16.msra.mxu0 %v699
    %1053 = vmatprep.subr.bf16.mxu0 %v730
    %1054 = vmatpush2.bf16.msra.mxu0 %v729
    %1055 = vmatprep.subr.bf16.mxu0 %v728
    %1056 = vmatpush2.bf16.msra.mxu0 %v727
    %1057 = vmatprep.subr.bf16.mxu0 %v726
    %1058 = vmatpush2.bf16.msra.mxu0 %v725
    %1059 = vmatprep.subr.bf16.mxu0 %v724
    %1060 = vmatpush2.bf16.msra.mxu0 %v723
    %1061 = vmatprep.subr.bf16.mxu0 %v722
    %1062 = vmatpush2.bf16.msra.mxu0 %v721
    %1063 = vmatprep.subr.bf16.mxu0 %v720
    %1064 = vmatpush2.bf16.msra.mxu0 %v719
    %1065 = vmatprep.subr.bf16.mxu0 %v718
    %1066 = vmatpush2.bf16.msra.mxu0 %v717
    %1067 = vmatprep.subr.bf16.mxu0 %v716
    %1068 = vmatpush2.bf16.msra.mxu0 %v715
    %1069 = vmatprep.mubr.bf16.mxu0 %v84
    %1070 = vmatmul.mubr.bf16.gmra.mxu0 %v83
    %v1071 = vpop.f32.mrf.mxu0
    %v1072 = vadd.f32 %v999, %v1071
    %v1073 = vpop.f32.mrf.mxu0
    %v1074 = vadd.f32 %v1001, %v1073
    %v1075 = vpop.f32.mrf.mxu0
    %v1076 = vadd.f32 %v1003, %v1075
    %v1077 = vpop.f32.mrf.mxu0
    %v1078 = vadd.f32 %v1005, %v1077
    %1079 = vmatprep.mubr.bf16.mxu0 %v92
    %1080 = vmatmul.mubr.bf16.gmra.mxu0 %v91
    %v1081 = vpop.f32.mrf.mxu0
    %v1082 = vadd.f32 %v1009, %v1081
    %v1083 = vpop.f32.mrf.mxu0
    %v1084 = vadd.f32 %v1011, %v1083
    %v1085 = vpop.f32.mrf.mxu0
    %v1086 = vadd.f32 %v1013, %v1085
    %v1087 = vpop.f32.mrf.mxu0
    %v1088 = vadd.f32 %v1015, %v1087
    %1089 = vmatprep.mubr.bf16.mxu0 %v100
    %1090 = vmatmul.mubr.bf16.gmra.mxu0 %v99
    %v1091 = vpop.f32.mrf.mxu0
    %v1092 = vadd.f32 %v1019, %v1091
    %v1093 = vpop.f32.mrf.mxu0
    %v1094 = vadd.f32 %v1021, %v1093
    %v1095 = vpop.f32.mrf.mxu0
    %v1096 = vadd.f32 %v1023, %v1095
    %v1097 = vpop.f32.mrf.mxu0
    %v1098 = vadd.f32 %v1025, %v1097
    %1099 = vmatprep.mubr.bf16.mxu0 %v108
    %1100 = vmatmul.mubr.bf16.gmra.mxu0 %v107
    %v1101 = vpop.f32.mrf.mxu0
    %v1102 = vadd.f32 %v1029, %v1101
    %v1103 = vpop.f32.mrf.mxu0
    %v1104 = vadd.f32 %v1031, %v1103
    %v1105 = vpop.f32.mrf.mxu0
    %v1106 = vadd.f32 %v1033, %v1105
    %v1107 = vpop.f32.mrf.mxu0
    %v1108 = vadd.f32 %v1035, %v1107
    %1109 = vdwg.mxu0
    %1110 = vmatprep.subr.bf16.mxu0 %v746
    %1111 = vmatpush1.bf16.msra.mxu0 %v745
    %1112 = vmatprep.subr.bf16.mxu0 %v744
    %1113 = vmatpush1.bf16.msra.mxu0 %v743
    %1114 = vmatprep.subr.bf16.mxu0 %v742
    %1115 = vmatpush1.bf16.msra.mxu0 %v741
    %1116 = vmatprep.subr.bf16.mxu0 %v740
    %1117 = vmatpush1.bf16.msra.mxu0 %v739
    %1118 = vmatprep.subr.bf16.mxu0 %v738
    %1119 = vmatpush1.bf16.msra.mxu0 %v737
    %1120 = vmatprep.subr.bf16.mxu0 %v736
    %1121 = vmatpush1.bf16.msra.mxu0 %v735
    %1122 = vmatprep.subr.bf16.mxu0 %v734
    %1123 = vmatpush1.bf16.msra.mxu0 %v733
    %1124 = vmatprep.subr.bf16.mxu0 %v732
    %1125 = vmatpush1.bf16.msra.mxu0 %v731
    %1126 = vmatprep.subr.bf16.mxu0 %v762
    %1127 = vmatpush2.bf16.msra.mxu0 %v761
    %1128 = vmatprep.subr.bf16.mxu0 %v760
    %1129 = vmatpush2.bf16.msra.mxu0 %v759
    %1130 = vmatprep.subr.bf16.mxu0 %v758
    %1131 = vmatpush2.bf16.msra.mxu0 %v757
    %1132 = vmatprep.subr.bf16.mxu0 %v756
    %1133 = vmatpush2.bf16.msra.mxu0 %v755
    %1134 = vmatprep.subr.bf16.mxu0 %v754
    %1135 = vmatpush2.bf16.msra.mxu0 %v753
    %1136 = vmatprep.subr.bf16.mxu0 %v752
    %1137 = vmatpush2.bf16.msra.mxu0 %v751
    %1138 = vmatprep.subr.bf16.mxu0 %v750
    %1139 = vmatpush2.bf16.msra.mxu0 %v749
    %1140 = vmatprep.subr.bf16.mxu0 %v748
    %1141 = vmatpush2.bf16.msra.mxu0 %v747
    %1142 = vmatprep.mubr.bf16.mxu0 %v86
    %1143 = vmatmul.mubr.bf16.gmra.mxu0 %v85
    %v1144 = vpop.f32.mrf.mxu0
    %v1145 = vadd.f32 %v1072, %v1144
    %v1146 = vpop.f32.mrf.mxu0
    %v1147 = vadd.f32 %v1074, %v1146
    %v1148 = vpop.f32.mrf.mxu0
    %v1149 = vadd.f32 %v1076, %v1148
    %v1150 = vpop.f32.mrf.mxu0
    %v1151 = vadd.f32 %v1078, %v1150
    %1152 = vmatprep.mubr.bf16.mxu0 %v94
    %1153 = vmatmul.mubr.bf16.gmra.mxu0 %v93
    %v1154 = vpop.f32.mrf.mxu0
    %v1155 = vadd.f32 %v1082, %v1154
    %v1156 = vpop.f32.mrf.mxu0
    %v1157 = vadd.f32 %v1084, %v1156
    %v1158 = vpop.f32.mrf.mxu0
    %v1159 = vadd.f32 %v1086, %v1158
    %v1160 = vpop.f32.mrf.mxu0
    %v1161 = vadd.f32 %v1088, %v1160
    %1162 = vmatprep.mubr.bf16.mxu0 %v102
    %1163 = vmatmul.mubr.bf16.gmra.mxu0 %v101
    %v1164 = vpop.f32.mrf.mxu0
    %v1165 = vadd.f32 %v1092, %v1164
    %v1166 = vpop.f32.mrf.mxu0
    %v1167 = vadd.f32 %v1094, %v1166
    %v1168 = vpop.f32.mrf.mxu0
    %v1169 = vadd.f32 %v1096, %v1168
    %v1170 = vpop.f32.mrf.mxu0
    %v1171 = vadd.f32 %v1098, %v1170
    %1172 = vmatprep.mubr.bf16.mxu0 %v110
    %1173 = vmatmul.mubr.bf16.gmra.mxu0 %v109
    %v1174 = vpop.f32.mrf.mxu0
    %v1175 = vadd.f32 %v1102, %v1174
    %v1176 = vpop.f32.mrf.mxu0
    %v1177 = vadd.f32 %v1104, %v1176
    %v1178 = vpop.f32.mrf.mxu0
    %v1179 = vadd.f32 %v1106, %v1178
    %v1180 = vpop.f32.mrf.mxu0
    %v1181 = vadd.f32 %v1108, %v1180
    %1182 = vdwg.mxu0
    %v1183 = vmax.f32 %v1145, 0.0
    %v1184 = vmax.f32 %v1147, 0.0
    %v1185 = vmax.f32 %v1149, 0.0
    %v1186 = vmax.f32 %v1151, 0.0
    %v1187 = vmax.f32 %v1155, 0.0
    %v1188 = vmax.f32 %v1157, 0.0
    %v1189 = vmax.f32 %v1159, 0.0
    %v1190 = vmax.f32 %v1161, 0.0
    %v1191 = vmax.f32 %v1165, 0.0
    %v1192 = vmax.f32 %v1167, 0.0
    %v1193 = vmax.f32 %v1169, 0.0
    %v1194 = vmax.f32 %v1171, 0.0
    %v1195 = vmax.f32 %v1175, 0.0
    %v1196 = vmax.f32 %v1177, 0.0
    %v1197 = vmax.f32 %v1179, 0.0
    %v1198 = vmax.f32 %v1181, 0.0
    %v1199 = vpack.c.bf16 %v1185, %v1183
    %v1200 = vpack.c.bf16 %v1186, %v1184
    %v1201 = vpack.c.bf16 %v1189, %v1187
    %v1202 = vpack.c.bf16 %v1190, %v1188
    %v1203 = vpack.c.bf16 %v1193, %v1191
    %v1204 = vpack.c.bf16 %v1194, %v1192
    %v1205 = vpack.c.bf16 %v1197, %v1195
    %v1206 = vpack.c.bf16 %v1198, %v1196
    %v1207 = vld [vmem:[#allocation7] sm:$0xf]
    %v1208 = vld [vmem:[#allocation7 + $0x4] sm:$0xf]
    %v1209 = vld [vmem:[#allocation7 + $0x8] sm:$0xf]
    %v1210 = vld [vmem:[#allocation7 + $0xc] sm:$0xf]
    %v1211 = vld [vmem:[#allocation7 + $0x10] sm:$0xf]
    %v1212 = vld [vmem:[#allocation7 + $0x14] sm:$0xf]
    %v1213 = vld [vmem:[#allocation7 + $0x18] sm:$0xf]
    %v1214 = vld [vmem:[#allocation7 + $0x1c] sm:$0xf]
    %v1215 = vld [vmem:[#allocation7 + $0x20] sm:$0xf]
    %v1216 = vld [vmem:[#allocation7 + $0x24] sm:$0xf]
    %v1217 = vld [vmem:[#allocation7 + $0x28] sm:$0xf]
    %v1218 = vld [vmem:[#allocation7 + $0x2c] sm:$0xf]
    %v1219 = vld [vmem:[#allocation7 + $0x30] sm:$0xf]
    %v1220 = vld [vmem:[#allocation7 + $0x34] sm:$0xf]
    %v1221 = vld [vmem:[#allocation7 + $0x38] sm:$0xf]
    %v1222 = vld [vmem:[#allocation7 + $0x3c] sm:$0xf]
    %v1223 = vld [vmem:[#allocation7 + $0x40] sm:$0xf]
    %v1224 = vld [vmem:[#allocation7 + $0x44] sm:$0xf]
    %v1225 = vld [vmem:[#allocation7 + $0x48] sm:$0xf]
    %v1226 = vld [vmem:[#allocation7 + $0x4c] sm:$0xf]
    %v1227 = vld [vmem:[#allocation7 + $0x50] sm:$0xf]
    %v1228 = vld [vmem:[#allocation7 + $0x54] sm:$0xf]
    %v1229 = vld [vmem:[#allocation7 + $0x58] sm:$0xf]
    %v1230 = vld [vmem:[#allocation7 + $0x5c] sm:$0xf]
    %v1231 = vld [vmem:[#allocation7 + $0x60] sm:$0xf]
    %v1232 = vld [vmem:[#allocation7 + $0x64] sm:$0xf]
    %v1233 = vld [vmem:[#allocation7 + $0x68] sm:$0xf]
    %v1234 = vld [vmem:[#allocation7 + $0x6c] sm:$0xf]
    %v1235 = vld [vmem:[#allocation7 + $0x70] sm:$0xf]
    %v1236 = vld [vmem:[#allocation7 + $0x74] sm:$0xf]
    %v1237 = vld [vmem:[#allocation7 + $0x78] sm:$0xf]
    %v1238 = vld [vmem:[#allocation7 + $0x7c] sm:$0xf]
    %v1239 = vld [vmem:[%s4] sm:$0x1]
    %v1241 = vlaneseq
    %v1242 = vshrl.u32 %v1241, 7
    %v1243 = vsub.s32 0, %v1242
    %v1244 = vrot.slane %v1239, %v1243
    %v1278 = vunpack.c.l.b16 %v1207
    %v1279 = vunpack.c.l.b16 %v1208
    %v1280 = vunpack.c.l.b16 %v1209
    %v1281 = vunpack.c.l.b16 %v1210
    %v1282 = vunpack.c.l.b16 %v1211
    %v1283 = vunpack.c.l.b16 %v1212
    %v1284 = vunpack.c.l.b16 %v1213
    %v1285 = vunpack.c.l.b16 %v1214
    %v1286 = vunpack.c.l.b16 %v1215
    %v1287 = vunpack.c.l.b16 %v1216
    %v1288 = vunpack.c.l.b16 %v1217
    %v1289 = vunpack.c.l.b16 %v1218
    %v1290 = vunpack.c.l.b16 %v1219
    %v1291 = vunpack.c.l.b16 %v1220
    %v1292 = vunpack.c.l.b16 %v1221
    %v1293 = vunpack.c.l.b16 %v1222
    %v1294 = vunpack.c.l.b16 %v1223
    %v1295 = vunpack.c.l.b16 %v1224
    %v1296 = vunpack.c.l.b16 %v1225
    %v1297 = vunpack.c.l.b16 %v1226
    %v1298 = vunpack.c.l.b16 %v1227
    %v1299 = vunpack.c.l.b16 %v1228
    %v1300 = vunpack.c.l.b16 %v1229
    %v1301 = vunpack.c.l.b16 %v1230
    %v1302 = vunpack.c.l.b16 %v1231
    %v1303 = vunpack.c.l.b16 %v1232
    %v1304 = vunpack.c.l.b16 %v1233
    %v1305 = vunpack.c.l.b16 %v1234
    %v1306 = vunpack.c.l.b16 %v1235
    %v1307 = vunpack.c.l.b16 %v1236
    %v1308 = vunpack.c.l.b16 %v1237
    %v1309 = vunpack.c.l.b16 %v1238
    %v1310 = vpack.c.b16 %v1279, %v1278
    %v1311 = vpack.c.b16 %v1281, %v1280
    %v1312 = vpack.c.b16 %v1283, %v1282
    %v1313 = vpack.c.b16 %v1285, %v1284
    %v1314 = vpack.c.b16 %v1287, %v1286
    %v1315 = vpack.c.b16 %v1289, %v1288
    %v1316 = vpack.c.b16 %v1291, %v1290
    %v1317 = vpack.c.b16 %v1293, %v1292
    %v1318 = vpack.c.b16 %v1295, %v1294
    %v1319 = vpack.c.b16 %v1297, %v1296
    %v1320 = vpack.c.b16 %v1299, %v1298
    %v1321 = vpack.c.b16 %v1301, %v1300
    %v1322 = vpack.c.b16 %v1303, %v1302
    %v1323 = vpack.c.b16 %v1305, %v1304
    %v1324 = vpack.c.b16 %v1307, %v1306
    %v1325 = vpack.c.b16 %v1309, %v1308
    %1342 = vmatprep.subr.bf16.mxu0 0
    %1343 = vmatpush1.bf16.msra.mxu0 %v1317
    %1344 = vmatprep.subr.bf16.mxu0 0
    %1345 = vmatpush1.bf16.msra.mxu0 %v1316
    %1346 = vmatprep.subr.bf16.mxu0 0
    %1347 = vmatpush1.bf16.msra.mxu0 %v1315
    %1348 = vmatprep.subr.bf16.mxu0 0
    %1349 = vmatpush1.bf16.msra.mxu0 %v1314
    %1350 = vmatprep.subr.bf16.mxu0 0
    %1351 = vmatpush1.bf16.msra.mxu0 %v1313
    %1352 = vmatprep.subr.bf16.mxu0 0
    %1353 = vmatpush1.bf16.msra.mxu0 %v1312
    %1354 = vmatprep.subr.bf16.mxu0 0
    %1355 = vmatpush1.bf16.msra.mxu0 %v1311
    %1356 = vmatprep.subr.bf16.mxu0 0
    %1357 = vmatpush1.bf16.msra.mxu0 %v1310
    %1358 = vmatprep.subr.bf16.mxu0 0
    %1359 = vmatpush2.bf16.msra.mxu0 %v1325
    %1360 = vmatprep.subr.bf16.mxu0 0
    %1361 = vmatpush2.bf16.msra.mxu0 %v1324
    %1362 = vmatprep.subr.bf16.mxu0 0
    %1363 = vmatpush2.bf16.msra.mxu0 %v1323
    %1364 = vmatprep.subr.bf16.mxu0 0
    %1365 = vmatpush2.bf16.msra.mxu0 %v1322
    %1366 = vmatprep.subr.bf16.mxu0 0
    %1367 = vmatpush2.bf16.msra.mxu0 %v1321
    %1368 = vmatprep.subr.bf16.mxu0 0
    %1369 = vmatpush2.bf16.msra.mxu0 %v1320
    %1370 = vmatprep.subr.bf16.mxu0 0
    %1371 = vmatpush2.bf16.msra.mxu0 %v1319
    %1372 = vmatprep.subr.bf16.mxu0 0
    %1373 = vmatpush2.bf16.msra.mxu0 %v1318
    %1374 = vmatprep.mubr.bf16.mxu0 %v1200
    %1375 = vmatmul.mubr.bf16.gmra.mxu0 %v1199
    %v1376 = vpop.f32.mrf.mxu0
    %v1377 = vadd.f32 %v1244, %v1376
    %v1378 = vpop.f32.mrf.mxu0
    %v1379 = vpop.f32.mrf.mxu0
    %v1380 = vadd.f32 %v1244, %v1379
    %v1381 = vpop.f32.mrf.mxu0
    %1382 = vmatprep.mubr.bf16.mxu0 %v1202
    %1383 = vmatmul.mubr.bf16.gmra.mxu0 %v1201
    %v1384 = vpop.f32.mrf.mxu0
    %v1385 = vadd.f32 %v1244, %v1384
    %v1386 = vpop.f32.mrf.mxu0
    %v1387 = vpop.f32.mrf.mxu0
    %v1388 = vadd.f32 %v1244, %v1387
    %v1389 = vpop.f32.mrf.mxu0
    %1390 = vmatprep.mubr.bf16.mxu0 %v1204
    %1391 = vmatmul.mubr.bf16.gmra.mxu0 %v1203
    %v1392 = vpop.f32.mrf.mxu0
    %v1393 = vadd.f32 %v1244, %v1392
    %v1394 = vpop.f32.mrf.mxu0
    %v1395 = vpop.f32.mrf.mxu0
    %v1396 = vadd.f32 %v1244, %v1395
    %v1397 = vpop.f32.mrf.mxu0
    %1398 = vmatprep.mubr.bf16.mxu0 %v1206
    %1399 = vmatmul.mubr.bf16.gmra.mxu0 %v1205
    %v1400 = vpop.f32.mrf.mxu0
    %v1401 = vadd.f32 %v1244, %v1400
    %v1402 = vpop.f32.mrf.mxu0
    %v1403 = vpop.f32.mrf.mxu0
    %v1404 = vadd.f32 %v1244, %v1403
    %v1405 = vpop.f32.mrf.mxu0
    %1406 = vdwg.mxu0
    %1407 = vst [vmem:[#allocation8] sm:$0xff] %v1377
    %1408 = vst [vmem:[#allocation8 + $0x8] sm:$0xff] %v1380
    %1409 = vst [vmem:[#allocation8 + $0x10] sm:$0xff] %v1385
    %1410 = vst [vmem:[#allocation8 + $0x18] sm:$0xff] %v1388
    %1411 = vst [vmem:[#allocation8 + $0x20] sm:$0xff] %v1393
    %1412 = vst [vmem:[#allocation8 + $0x28] sm:$0xff] %v1396
    %1413 = vst [vmem:[#allocation8 + $0x30] sm:$0xff] %v1401
    %1414 = vst [vmem:[#allocation8 + $0x38] sm:$0xff] %v1404
    // Predicated region
    $region34: #{tpu_custom_call.1} parent=1 // pred_check
      _
    $region35: #{tpu_custom_call.1} parent=1 // pred_check_branch
      %1416 = sbr.rel (0) target = $region37
    $region36: #{tpu_custom_call.1} parent=1 // pred_region
      %s1418 = ssub.s32 1024, 1024
      %1419 = vsyncadd [#allocation4], %s1418
      %s1420 = sshll.u32 [#allocation8], 4
      %s1421 = int_to_ptr.vmem [resolvable:$true] %s1420
      %1426 = dma.vmem_to_hbm [thread:$0]  %s1421, 1024, %s5, [#allocation4], 128, 128, 8
    $region37: #{tpu_custom_call.1} parent=1 // pred_fallthru
      _
    // Predicated region
    $region38: #{tpu_custom_call.1} parent=1 // pred_check
      _
    $region39: #{tpu_custom_call.1} parent=1 // pred_check_branch
      %1428 = sbr.rel (0) target = $region41
    $region40: #{tpu_custom_call.1} parent=1 // pred_region
      %1429 = dma.done [#allocation4], 1024
    $region41: #{tpu_custom_call.1} parent=1 // pred_fallthru
      _
    %1430 = vsyncpa [#allocation3], 1
    %1431 = vsyncpa [#allocation6], 1
    %1432 = vsyncpa [#allocation4], 1

</llo_original>
